<compile_context>
chip_gen: v7x
topology: tpu7x:2x2x1
jax: 0.10.0
libtpu: 0.0.40
codegen_flags: <defaults>
</compile_context>

<pallas_src>
import functools

import jax
import jax.numpy as jnp
from jax.experimental import pallas as pl
from jax.experimental.pallas import tpu as pltpu

LANE = 128       # lane-dense padding target for feature dims
MAX_TM = 1024    # batch tile; ~1.3 MiB double-buffered per tile, tiny vs. 64 MiB v7x VMEM


def _round_up(n, m):
    return ((n + m - 1) // m) * m


def _batch_tiling(batch):
    """Pick (padded_batch, batch_tile). Guarantees >=2 grid steps for batch>=512 (v7x megacore)."""
    batch_8 = _round_up(batch, 8)
    if batch_8 < 512:
        tm = batch_8                                   # single tile, single grid step
    else:
        tm = min(MAX_TM, _round_up(pl.cdiv(batch_8, 2), 8))
    batch_p = _round_up(batch_8, tm)
    return batch_p, tm


def _mlp_kernel(x_ref, w1_ref, b1_ref, w2_ref, b2_ref, o_ref):
    # x read from HBM as f32 (4 B/elem, no wrapper pre-cast), cast to bf16 on the VPU.
    x = x_ref[...].astype(jnp.bfloat16)                                   # (TM, IN)
    h = jnp.dot(x, w1_ref[...], preferred_element_type=jnp.float32)       # (TM, HID_P) f32
    h = jnp.maximum(h + b1_ref[...], 0.0)                                 # bias + ReLU in f32
    out = jnp.dot(h.astype(jnp.bfloat16), w2_ref[...],
                  preferred_element_type=jnp.float32)                     # (TM, OUT_P) f32
    o_ref[...] = out + b2_ref[...]


def prepare_params(w1, b1, w2, b2):
    """Pad feature dims to 128 lanes and cast ONCE (call outside the per-step forward path).

    Inputs: w1 (in, hidden), b1 (1, hidden), w2 (hidden, num_classes), b2 (1, num_classes).
    """
    hidden = w1.shape[1]
    num_classes = w2.shape[1]
    hid_p = _round_up(hidden, LANE)        # 50  -> 128
    out_p = _round_up(num_classes, LANE)   # 10  -> 128
    w1_p = jnp.pad(w1, ((0, 0), (0, hid_p - hidden))).astype(jnp.bfloat16)
    b1_p = jnp.pad(b1, ((0, 0), (0, hid_p - hidden))).astype(jnp.float32)
    w2_p = jnp.pad(w2, ((0, hid_p - hidden), (0, out_p - num_classes))).astype(jnp.bfloat16)
    b2_p = jnp.pad(b2, ((0, 0), (0, out_p - num_classes))).astype(jnp.float32)
    return w1_p, b1_p, w2_p, b2_p


@functools.partial(jax.jit, static_argnames=("num_classes",))
def neural_network_forward(x, w1_p, b1_p, w2_p, b2_p, *, num_classes):
    """Pallas equivalent of fc2(relu(fc1(x))). Params must be pre-padded via prepare_params."""
    batch, input_size = x.shape
    hid_p = w1_p.shape[1]
    out_p = w2_p.shape[1]

    batch_p, tm = _batch_tiling(batch)
    if batch_p != batch:
        x = jnp.pad(x, ((0, batch_p - batch), (0, 0)))   # f32 pad only when needed

    # Advisory cost estimate (helps XLA schedule surrounding fusions around the call).
    flops = 2 * batch_p * (input_size * hid_p + hid_p * out_p)
    bytes_accessed = (batch_p * input_size * 4 + batch_p * out_p * 4
                      + w1_p.size * 2 + w2_p.size * 2 + b1_p.size * 4 + b2_p.size * 4)

    out = pl.pallas_call(
        _mlp_kernel,
        out_shape=jax.ShapeDtypeStruct((batch_p, out_p), jnp.float32),
        grid=(batch_p // tm,),
        in_specs=[
            pl.BlockSpec((tm, input_size), lambda i: (i, 0)),    # x: tiled over batch
            pl.BlockSpec((input_size, hid_p), lambda i: (0, 0)),  # weights/biases VMEM-resident
            pl.BlockSpec((1, hid_p), lambda i: (0, 0)),
            pl.BlockSpec((hid_p, out_p), lambda i: (0, 0)),
            pl.BlockSpec((1, out_p), lambda i: (0, 0)),
        ],
        out_specs=pl.BlockSpec((tm, out_p), lambda i: (i, 0)),
        compiler_params=pltpu.CompilerParams(
            dimension_semantics=("parallel",)),
        cost_estimate=pl.CostEstimate(flops=flops, transcendentals=0,
                                      bytes_accessed=bytes_accessed),
    )(x, w1_p, b1_p, w2_p, b2_p)

    # Slice stays inside this jit so XLA fuses it with the kernel's output copy.
    return out[:batch, :num_classes]


def init_params(key, input_size, num_classes, hidden=50):
    """Deterministic init mimicking nn.Linear (uniform +/- 1/sqrt(fan_in)), stored (in, out)."""
    k1, k2, k3, k4 = jax.random.split(key, 4)
    bound1 = 1.0 / jnp.sqrt(jnp.float32(input_size))
    bound2 = 1.0 / jnp.sqrt(jnp.float32(hidden))
    w1 = jax.random.uniform(k1, (input_size, hidden), jnp.float32, -bound1, bound1)
    b1 = jax.random.uniform(k2, (1, hidden), jnp.float32, -bound1, bound1)
    w2 = jax.random.uniform(k3, (hidden, num_classes), jnp.float32, -bound2, bound2)
    b2 = jax.random.uniform(k4, (1, num_classes), jnp.float32, -bound2, bound2)
    return w1, b1, w2, b2


if __name__ == "__main__":
    input_size = 32
    num_classes = 10
    batch = 8

    key = jax.random.PRNGKey(0)
    kx, kp = jax.random.split(key)
    x = jax.random.normal(kx, (batch, input_size), jnp.float32)
    w1, b1, w2, b2 = init_params(kp, input_size, num_classes)

    # Pad/cast parameters once, outside the per-call path.
    w1_p, b1_p, w2_p, b2_p = prepare_params(w1, b1, w2, b2)

    out = neural_network_forward(x, w1_p, b1_p, w2_p, b2_p, num_classes=num_classes)
    out = jax.block_until_ready(out)
    assert out.shape == (batch, num_classes)

    # Precision-matched pure-JAX reference (bf16 matmul operands, f32 accumulate, f32 bias/ReLU).
    xb, w1b, w2b = x.astype(jnp.bfloat16), w1.astype(jnp.bfloat16), w2.astype(jnp.bfloat16)
    h_ref = jnp.maximum(jnp.dot(xb, w1b, preferred_element_type=jnp.float32) + b1, 0.0)
    ref = jnp.dot(h_ref.astype(jnp.bfloat16), w2b, preferred_element_type=jnp.float32) + b2
    assert jnp.allclose(out, ref, atol=1e-3, rtol=1e-3)

    print("KERNEL_OK")
</pallas_src>

<mosaic_0001>
module attributes {stable_mosaic.version = 11 : i64} {
  func.func @_mlp_kernel(%arg0: i32, %arg1: memref<8x32xf32, #tpu.memory_space<vmem>>, %arg2: memref<32x128xbf16, #tpu.memory_space<vmem>>, %arg3: memref<1x128xf32, #tpu.memory_space<vmem>>, %arg4: memref<128x128xbf16, #tpu.memory_space<vmem>>, %arg5: memref<1x128xf32, #tpu.memory_space<vmem>>, %arg6: memref<8x128xf32, #tpu.memory_space<vmem>>) attributes {dimension_semantics = [#tpu.dimension_semantics<parallel>], iteration_bounds = array<i64: 1>, scalar_prefetch = 0 : i64, scratch_operands = 0 : i64, tpu.core_type = #tpu.core_type<tc>, window_params = [{transform_indices = @transform_0, window_bounds = array<i64: 8, 32>}, {pipeline_mode = #tpu.pipeline_mode<synchronous>, transform_indices = @transform_1, window_bounds = array<i64: 32, 128>}, {pipeline_mode = #tpu.pipeline_mode<synchronous>, transform_indices = @transform_2, window_bounds = array<i64: 1, 128>}, {pipeline_mode = #tpu.pipeline_mode<synchronous>, transform_indices = @transform_3, window_bounds = array<i64: 128, 128>}, {pipeline_mode = #tpu.pipeline_mode<synchronous>, transform_indices = @transform_4, window_bounds = array<i64: 1, 128>}, {transform_indices = @transform_5, window_bounds = array<i64: 8, 128>}]} {
    %c0 = arith.constant 0 : index
    %c0_0 = arith.constant 0 : index
    %0 = vector.load %arg1[%c0, %c0_0] : memref<8x32xf32, #tpu.memory_space<vmem>>, vector<8x32xf32>
    %1 = arith.truncf %0 : vector<8x32xf32> to vector<8x32xbf16>
    %c0_1 = arith.constant 0 : index
    %c0_2 = arith.constant 0 : index
    %2 = vector.load %arg2[%c0_1, %c0_2] : memref<32x128xbf16, #tpu.memory_space<vmem>>, vector<32x128xbf16>
    %cst = arith.constant dense<0.000000e+00> : vector<8x128xf32>
    %3 = tpu.matmul %1, %2, %cst {dimension_numbers = #tpu.dot_dimension_numbers<[1], [0], [0], [1], [0, 0, 1, 1], [], []>} : vector<8x32xbf16>, vector<32x128xbf16>, vector<8x128xf32> -> vector<8x128xf32>
    %c0_3 = arith.constant 0 : index
    %c0_4 = arith.constant 0 : index
    %4 = vector.load %arg3[%c0_3, %c0_4] : memref<1x128xf32, #tpu.memory_space<vmem>>, vector<1x128xf32>
    %5 = vector.broadcast %4 : vector<1x128xf32> to vector<8x128xf32>
    %6 = arith.addf %3, %5 : vector<8x128xf32>
    %cst_5 = arith.constant 0.000000e+00 : f32
    %7 = vector.broadcast %cst_5 : f32 to vector<8x128xf32>
    %8 = arith.maximumf %6, %7 : vector<8x128xf32>
    %9 = arith.truncf %8 : vector<8x128xf32> to vector<8x128xbf16>
    %c0_6 = arith.constant 0 : index
    %c0_7 = arith.constant 0 : index
    %10 = vector.load %arg4[%c0_6, %c0_7] : memref<128x128xbf16, #tpu.memory_space<vmem>>, vector<128x128xbf16>
    %cst_8 = arith.constant dense<0.000000e+00> : vector<8x128xf32>
    %11 = tpu.matmul %9, %10, %cst_8 {dimension_numbers = #tpu.dot_dimension_numbers<[1], [0], [0], [1], [0, 0, 1, 1], [], []>} : vector<8x128xbf16>, vector<128x128xbf16>, vector<8x128xf32> -> vector<8x128xf32>
    %c0_9 = arith.constant 0 : index
    %c0_10 = arith.constant 0 : index
    %12 = vector.load %arg5[%c0_9, %c0_10] : memref<1x128xf32, #tpu.memory_space<vmem>>, vector<1x128xf32>
    %13 = vector.broadcast %12 : vector<1x128xf32> to vector<8x128xf32>
    %14 = arith.addf %11, %13 : vector<8x128xf32>
    %c0_11 = arith.constant 0 : index
    %c0_12 = arith.constant 0 : index
    %15 = vector.load %arg6[%c0_11, %c0_12] : memref<8x128xf32, #tpu.memory_space<vmem>>, vector<8x128xf32>
    tpu.vector_store %arg6[%c0_11, %c0_12], %14 {strides = array<i32>} : memref<8x128xf32, #tpu.memory_space<vmem>>, vector<8x128xf32>,
    return
  }
  func.func @transform_0(%arg0: i32) -> (i32, i32) {
    %c0_i32 = arith.constant 0 : i32
    %c0_i32_0 = arith.constant 0 : i32
    return %arg0, %c0_i32 : i32, i32
  }
  func.func @transform_1(%arg0: i32) -> (i32, i32) {
    %c0_i32 = arith.constant 0 : i32
    %c0_i32_0 = arith.constant 0 : i32
    %c0_i32_1 = arith.constant 0 : i32
    return %c0_i32, %c0_i32_0 : i32, i32
  }
  func.func @transform_2(%arg0: i32) -> (i32, i32) {
    %c0_i32 = arith.constant 0 : i32
    %c0_i32_0 = arith.constant 0 : i32
    %c0_i32_1 = arith.constant 0 : i32
    return %c0_i32, %c0_i32_0 : i32, i32
  }
  func.func @transform_3(%arg0: i32) -> (i32, i32) {
    %c0_i32 = arith.constant 0 : i32
    %c0_i32_0 = arith.constant 0 : i32
    %c0_i32_1 = arith.constant 0 : i32
    return %c0_i32, %c0_i32_0 : i32, i32
  }
  func.func @transform_4(%arg0: i32) -> (i32, i32) {
    %c0_i32 = arith.constant 0 : i32
    %c0_i32_0 = arith.constant 0 : i32
    %c0_i32_1 = arith.constant 0 : i32
    return %c0_i32, %c0_i32_0 : i32, i32
  }
  func.func @transform_5(%arg0: i32) -> (i32, i32) {
    %c0_i32 = arith.constant 0 : i32
    %c0_i32_0 = arith.constant 0 : i32
    return %arg0, %c0_i32 : i32, i32
  }
}

</mosaic_0001>

<llo_original>
// kernel: neural_network_forward.1
$region0: #{neural_network_forward.1}
  #allocation0 [shape = 'u32[]', space=smem, size = 0x4, offset = 0x4, fixed_abs, tag = 'smem constant byte address 0x4 - core index']
  #allocation1 [shape = 'u32[144,128]{1,0:T(1,128)}', space=vmem, size = 0x12000, scoped, tag = 'internal scratch']
  %s0 = inlined_call_operand.hbm [shape: f32[8,32], index: 0, kind: input, shape index: {}]
  %s1 = inlined_call_operand.hbm [shape: bf16[32,128], index: 1, kind: input, shape index: {}]
  %s2 = inlined_call_operand.vmem [shape: f32[1,128], index: 2, kind: input, shape index: {}]
  %s3 = inlined_call_operand.hbm [shape: bf16[128,128], index: 3, kind: input, shape index: {}]
  %s4 = inlined_call_operand.vmem [shape: f32[1,128], index: 4, kind: input, shape index: {}]
  %s5 = inlined_call_operand.hbm [shape: f32[8,128], index: 5, kind: output, shape index: {}]
  %s6 = sld [smem:[#allocation0]]
  $region42: #{neural_network_forward.1} parent=0
    _
  %s8 = ssub.s32 1, %s6
  %s9 = scalar_select 0, %s8, %s6
  $region1: #{neural_network_forward.1} parent=0
    #allocation2 [shape = 'u8[4096]{0}', space=vmem, size = 0x1000, scoped, tag = 'input window, operand 0, single buffered']
    #allocation3 [shape = 's32[1]{0}', space=sflag, size = 0x4, scoped, tag = 'scoped memory for neural_network_forward.1']
    #allocation4 [shape = 's32[1]{0}', space=sflag, size = 0x4, scoped, tag = 'scoped memory for neural_network_forward.1']
    #allocation5 [shape = 'u8[8192]{0}', space=vmem, size = 0x2000, scoped, tag = 'input window, operand 1, single buffered']
    #allocation6 [shape = 's32[1]{0}', space=sflag, size = 0x4, scoped, tag = 'scoped memory for neural_network_forward.1']
    #allocation7 [shape = 'u8[32768]{0}', space=vmem, size = 0x8000, scoped, tag = 'input window, operand 3, single buffered']
    #allocation8 [shape = 'u8[4096]{0}', space=vmem, size = 0x1000, scoped, tag = 'output window, operand 0, single buffered']
    %10 = vsyncpa [#allocation3], 0
    %11 = vsyncpa [#allocation6], 0
    %12 = vsyncpa [#allocation4], 0
    // Predicated region
    $region2: #{neural_network_forward.1} parent=1 // pred_check
      _
    $region3: #{neural_network_forward.1} parent=1 // pred_check_branch
      %14 = sbr.rel (0) target = $region5
    $region4: #{neural_network_forward.1} parent=1 // pred_region
      %s16 = ssub.s32 128, 128
      %17 = vsyncadd [#allocation3], %s16
      %s19 = sshll.u32 [#allocation2], 4
      %s20 = int_to_ptr.vmem [resolvable:$true] %s19
      %22 = dma.hbm_to_vmem [thread:$0]  %s0, 128, %s20, [#allocation3]
    $region5: #{neural_network_forward.1} parent=1 // pred_fallthru
      _
    // Predicated region
    $region6: #{neural_network_forward.1} parent=1 // pred_check
      _
    $region7: #{neural_network_forward.1} parent=1 // pred_check_branch
      %24 = sbr.rel (0) target = $region9
    $region8: #{neural_network_forward.1} parent=1 // pred_region
      %s26 = ssub.s32 256, 256
      %27 = vsyncadd [#allocation6], %s26
      %s28 = sshll.u32 [#allocation5], 4
      %s29 = int_to_ptr.vmem [resolvable:$true] %s28
      %34 = dma.hbm_to_vmem [thread:$0]  %s1, 256, %s29, [#allocation6], 64, 64, 4
    $region9: #{neural_network_forward.1} parent=1 // pred_fallthru
      _
    // Predicated region
    $region10: #{neural_network_forward.1} parent=1 // pred_check
      _
    $region11: #{neural_network_forward.1} parent=1 // pred_check_branch
      %36 = sbr.rel (0) target = $region13
    $region12: #{neural_network_forward.1} parent=1 // pred_region
      _
    $region13: #{neural_network_forward.1} parent=1 // pred_fallthru
      _
    // Predicated region
    $region14: #{neural_network_forward.1} parent=1 // pred_check
      _
    $region15: #{neural_network_forward.1} parent=1 // pred_check_branch
      %38 = sbr.rel (0) target = $region17
    $region16: #{neural_network_forward.1} parent=1 // pred_region
      %s40 = ssub.s32 1024, 1024
      %41 = vsyncadd [#allocation6], %s40
      %s42 = sshll.u32 [#allocation7], 4
      %s43 = int_to_ptr.vmem [resolvable:$true] %s42
      %48 = dma.hbm_to_vmem [thread:$0]  %s3, 1024, %s43, [#allocation6], 64, 64, 4
    $region17: #{neural_network_forward.1} parent=1 // pred_fallthru
      _
    // Predicated region
    $region18: #{neural_network_forward.1} parent=1 // pred_check
      _
    $region19: #{neural_network_forward.1} parent=1 // pred_check_branch
      %50 = sbr.rel (0) target = $region21
    $region20: #{neural_network_forward.1} parent=1 // pred_region
      _
    $region21: #{neural_network_forward.1} parent=1 // pred_fallthru
      _
    // Predicated region
    $region22: #{neural_network_forward.1} parent=1 // pred_check
      _
    $region23: #{neural_network_forward.1} parent=1 // pred_check_branch
      %52 = sbr.rel (0) target = $region25
    $region24: #{neural_network_forward.1} parent=1 // pred_region
      %53 = dma.done [#allocation3], 128
    $region25: #{neural_network_forward.1} parent=1 // pred_fallthru
      _
    // Predicated region
    $region26: #{neural_network_forward.1} parent=1 // pred_check
      _
    $region27: #{neural_network_forward.1} parent=1 // pred_check_branch
      %55 = sbr.rel (0) target = $region29
    $region28: #{neural_network_forward.1} parent=1 // pred_region
      %56 = dma.done [#allocation6], 256
    $region29: #{neural_network_forward.1} parent=1 // pred_fallthru
      _
    // Predicated region
    $region30: #{neural_network_forward.1} parent=1 // pred_check
      _
    $region31: #{neural_network_forward.1} parent=1 // pred_check_branch
      %58 = sbr.rel (0) target = $region33
    $region32: #{neural_network_forward.1} parent=1 // pred_region
      %59 = dma.done [#allocation6], 1024
    $region33: #{neural_network_forward.1} parent=1 // pred_fallthru
      _
    %v61 = vld [vmem:[#allocation2] sm:$0xff]
    %v62 = vpack.c.bf16 %v61, %v61
    %v63 = vld [vmem:[#allocation5] sm:$0xf]
    %v64 = vld [vmem:[#allocation5 + $0x4] sm:$0xf]
    %v65 = vld [vmem:[#allocation5 + $0x8] sm:$0xf]
    %v66 = vld [vmem:[#allocation5 + $0xc] sm:$0xf]
    %v67 = vld [vmem:[%s2] sm:$0x1]
    %v69 = vlaneseq
    %v70 = vshrl.u32 %v69, 7
    %v71 = vsub.s32 0, %v70
    %v72 = vrot.slane %v67, %v71
    %v78 = vunpack.c.l.b16 %v63
    %v79 = vunpack.c.l.b16 %v64
    %v80 = vunpack.c.l.b16 %v65
    %v81 = vunpack.c.l.b16 %v66
    %v82 = vpack.c.b16 %v79, %v78
    %v83 = vpack.c.b16 %v81, %v80
    %vm86 = vcmask 261120
    %v88 = vsel %vm86, %v62, 0
    %90 = vmatprep.subr.bf16.mxu0 0
    %91 = vmatpush1.bf16.msra.mxu0 %v82
    %92 = vmatprep.subr.bf16.mxu0 0
    %93 = vmatpush1.bf16.msra.mxu0 %v83
    %94 = vmatprep.subr.bf16.mxu0 0
    %95 = vmatpush1.bf16.msra.mxu0 0
    %96 = vmatprep.subr.bf16.mxu0 0
    %97 = vmatpush1.bf16.msra.mxu0 0
    %98 = vmatprep.subr.bf16.mxu0 0
    %99 = vmatpush1.bf16.msra.mxu0 0
    %100 = vmatprep.subr.bf16.mxu0 0
    %101 = vmatpush1.bf16.msra.mxu0 0
    %102 = vmatprep.subr.bf16.mxu0 0
    %103 = vmatpush1.bf16.msra.mxu0 0
    %104 = vmatprep.subr.bf16.mxu0 0
    %105 = vmatpush1.bf16.msra.mxu0 0
    %106 = vmatprep.subr.bf16.mxu0 0
    %107 = vmatpush1.bf16.msra.mxu0 0
    %108 = vmatprep.subr.bf16.mxu0 0
    %109 = vmatpush1.bf16.msra.mxu0 0
    %110 = vmatprep.subr.bf16.mxu0 0
    %111 = vmatpush1.bf16.msra.mxu0 0
    %112 = vmatprep.subr.bf16.mxu0 0
    %113 = vmatpush1.bf16.msra.mxu0 0
    %114 = vmatprep.subr.bf16.mxu0 0
    %115 = vmatpush1.bf16.msra.mxu0 0
    %116 = vmatprep.subr.bf16.mxu0 0
    %117 = vmatpush1.bf16.msra.mxu0 0
    %118 = vmatprep.subr.bf16.mxu0 0
    %119 = vmatpush1.bf16.msra.mxu0 0
    %120 = vmatprep.subr.bf16.mxu0 0
    %121 = vmatpush1.bf16.msra.mxu0 0
    %122 = vmatprep.mubr.bf16.mxu0 0
    %123 = vmatmul.mubr.bf16.gmra.mrb[0].mxu0 %v88
    %v124 = vpop.f32.mrb[0].mxu0
    %v125 = vadd.f32 %v72, %v124
    %v126 = vpop.f32.mrb[0].mxu0
    %v127 = vpop.f32.mrb[0].mxu0
    %v128 = vpop.f32.mrb[0].mxu0
    %129 = vdwg.mxu0
    %v130 = vmax.f32 %v125, 0.0
    %v131 = vpack.c.bf16 %v130, %v130
    %v132 = vld [vmem:[#allocation7] sm:$0xf]
    %v133 = vld [vmem:[#allocation7 + $0x4] sm:$0xf]
    %v134 = vld [vmem:[#allocation7 + $0x8] sm:$0xf]
    %v135 = vld [vmem:[#allocation7 + $0xc] sm:$0xf]
    %v136 = vld [vmem:[#allocation7 + $0x10] sm:$0xf]
    %v137 = vld [vmem:[#allocation7 + $0x14] sm:$0xf]
    %v138 = vld [vmem:[#allocation7 + $0x18] sm:$0xf]
    %v139 = vld [vmem:[#allocation7 + $0x1c] sm:$0xf]
    %v140 = vld [vmem:[#allocation7 + $0x20] sm:$0xf]
    %v141 = vld [vmem:[#allocation7 + $0x24] sm:$0xf]
    %v142 = vld [vmem:[#allocation7 + $0x28] sm:$0xf]
    %v143 = vld [vmem:[#allocation7 + $0x2c] sm:$0xf]
    %v144 = vld [vmem:[#allocation7 + $0x30] sm:$0xf]
    %v145 = vld [vmem:[#allocation7 + $0x34] sm:$0xf]
    %v146 = vld [vmem:[#allocation7 + $0x38] sm:$0xf]
    %v147 = vld [vmem:[#allocation7 + $0x3c] sm:$0xf]
    %v148 = vld [vmem:[%s4] sm:$0x1]
    %v150 = vlaneseq
    %v151 = vshrl.u32 %v150, 7
    %v152 = vsub.s32 0, %v151
    %v153 = vrot.slane %v148, %v152
    %v171 = vunpack.c.l.b16 %v132
    %v172 = vunpack.c.l.b16 %v133
    %v173 = vunpack.c.l.b16 %v134
    %v174 = vunpack.c.l.b16 %v135
    %v175 = vunpack.c.l.b16 %v136
    %v176 = vunpack.c.l.b16 %v137
    %v177 = vunpack.c.l.b16 %v138
    %v178 = vunpack.c.l.b16 %v139
    %v179 = vunpack.c.l.b16 %v140
    %v180 = vunpack.c.l.b16 %v141
    %v181 = vunpack.c.l.b16 %v142
    %v182 = vunpack.c.l.b16 %v143
    %v183 = vunpack.c.l.b16 %v144
    %v184 = vunpack.c.l.b16 %v145
    %v185 = vunpack.c.l.b16 %v146
    %v186 = vunpack.c.l.b16 %v147
    %v187 = vpack.c.b16 %v172, %v171
    %v188 = vpack.c.b16 %v174, %v173
    %v189 = vpack.c.b16 %v176, %v175
    %v190 = vpack.c.b16 %v178, %v177
    %v191 = vpack.c.b16 %v180, %v179
    %v192 = vpack.c.b16 %v182, %v181
    %v193 = vpack.c.b16 %v184, %v183
    %v194 = vpack.c.b16 %v186, %v185
    %203 = vmatprep.subr.bf16.mxu0 0
    %204 = vmatpush1.bf16.msra.mxu0 %v187
    %205 = vmatprep.subr.bf16.mxu0 0
    %206 = vmatpush1.bf16.msra.mxu0 %v188
    %207 = vmatprep.subr.bf16.mxu0 0
    %208 = vmatpush1.bf16.msra.mxu0 %v189
    %209 = vmatprep.subr.bf16.mxu0 0
    %210 = vmatpush1.bf16.msra.mxu0 %v190
    %211 = vmatprep.subr.bf16.mxu0 0
    %212 = vmatpush1.bf16.msra.mxu0 %v191
    %213 = vmatprep.subr.bf16.mxu0 0
    %214 = vmatpush1.bf16.msra.mxu0 %v192
    %215 = vmatprep.subr.bf16.mxu0 0
    %216 = vmatpush1.bf16.msra.mxu0 %v193
    %217 = vmatprep.subr.bf16.mxu0 0
    %218 = vmatpush1.bf16.msra.mxu0 %v194
    %219 = vmatprep.subr.bf16.mxu0 0
    %220 = vmatpush1.bf16.msra.mxu0 0
    %221 = vmatprep.subr.bf16.mxu0 0
    %222 = vmatpush1.bf16.msra.mxu0 0
    %223 = vmatprep.subr.bf16.mxu0 0
    %224 = vmatpush1.bf16.msra.mxu0 0
    %225 = vmatprep.subr.bf16.mxu0 0
    %226 = vmatpush1.bf16.msra.mxu0 0
    %227 = vmatprep.subr.bf16.mxu0 0
    %228 = vmatpush1.bf16.msra.mxu0 0
    %229 = vmatprep.subr.bf16.mxu0 0
    %230 = vmatpush1.bf16.msra.mxu0 0
    %231 = vmatprep.subr.bf16.mxu0 0
    %232 = vmatpush1.bf16.msra.mxu0 0
    %233 = vmatprep.subr.bf16.mxu0 0
    %234 = vmatpush1.bf16.msra.mxu0 0
    %235 = vmatprep.mubr.bf16.mxu0 0
    %236 = vmatmul.mubr.bf16.gmra.mrb[0].mxu0 %v131
    %v237 = vpop.f32.mrb[0].mxu0
    %v238 = vadd.f32 %v153, %v237
    %v239 = vpop.f32.mrb[0].mxu0
    %v240 = vpop.f32.mrb[0].mxu0
    %v241 = vpop.f32.mrb[0].mxu0
    %242 = vdwg.mxu0
    %243 = vst [vmem:[#allocation8] sm:$0xff] %v238
    // Predicated region
    $region34: #{neural_network_forward.1} parent=1 // pred_check
      _
    $region35: #{neural_network_forward.1} parent=1 // pred_check_branch
      %245 = sbr.rel (0) target = $region37
    $region36: #{neural_network_forward.1} parent=1 // pred_region
      %s247 = ssub.s32 128, 128
      %248 = vsyncadd [#allocation4], %s247
      %s250 = sshll.u32 [#allocation8], 4
      %s251 = int_to_ptr.vmem [resolvable:$true] %s250
      %253 = dma.vmem_to_hbm [thread:$0]  %s251, 128, %s5, [#allocation4]
    $region37: #{neural_network_forward.1} parent=1 // pred_fallthru
      _
    // Predicated region
    $region38: #{neural_network_forward.1} parent=1 // pred_check
      _
    $region39: #{neural_network_forward.1} parent=1 // pred_check_branch
      %255 = sbr.rel (0) target = $region41
    $region40: #{neural_network_forward.1} parent=1 // pred_region
      %256 = dma.done [#allocation4], 128
    $region41: #{neural_network_forward.1} parent=1 // pred_fallthru
      _
    %257 = vsyncpa [#allocation3], 1
    %258 = vsyncpa [#allocation6], 1
    %259 = vsyncpa [#allocation4], 1

</llo_original>
